<compile_context>
chip_gen: v5e
topology: v5e:2x2
jax: 0.10.0
libtpu: 0.0.40
codegen_flags: <defaults>
</compile_context>

<pallas_src>
import math
from functools import partial

import jax
import jax.numpy as jnp
from jax import lax
from jax.experimental import pallas as pl
from jax.experimental.pallas import tpu as pltpu


# ---------------------------------------------------------------------------
# Kernels
# ---------------------------------------------------------------------------
def _sdpa_kernel(q_ref, k_ref, v_ref, ctx_ref, attn_ref, *, scale):
    # q_ref: (1, TQ, D); k_ref/v_ref: (1, S, D); ctx_ref: (1, TQ, D);
    # attn_ref: (1, TQ, S) or None (ctx-only fast path).
    q = q_ref[0]
    k = k_ref[0]
    v = v_ref[0]

    # Fold 1/sqrt(d_k) into Q: TQ*D VPU multiplies instead of TQ*S.
    qs = q * jnp.asarray(scale, dtype=q.dtype)

    # scores = (Q * scale) @ K^T as an NT contraction so the MXU consumes the
    # (S, D) K tile directly (no explicit transpose).
    scores = lax.dot_general(
        qs, k,
        dimension_numbers=(((1,), (1,)), ((), ())),
        preferred_element_type=jnp.float32,
    )  # (TQ, S) f32

    # Numerically-stable softmax; the whole S axis is in-block so it is exact.
    m = jnp.max(scores, axis=-1, keepdims=True)
    e = jnp.exp(scores - m)
    denom = jnp.sum(e, axis=-1, keepdims=True)
    # Exact division: denom is only (TQ, 1) elements, so the cost is negligible
    # and we keep parity with torch.softmax (rows sum to 1 to f32 rounding).
    attn_f32 = e / denom

    # Cast once; reused for the PV matmul and (when dtypes match) the store.
    attn_lo = attn_f32.astype(v.dtype)

    ctx = lax.dot_general(
        attn_lo, v,
        dimension_numbers=(((1,), (0,)), ((), ())),
        preferred_element_type=jnp.float32,
    )  # (TQ, D) f32
    ctx_ref[0] = ctx.astype(ctx_ref.dtype)

    if attn_ref is not None:
        if attn_ref.dtype == v.dtype:
            attn_ref[0] = attn_lo            # no second VPU pass over (TQ, S)
        else:
            attn_ref[0] = attn_f32.astype(attn_ref.dtype)


def _sdpa_ctx_only_kernel(q_ref, k_ref, v_ref, ctx_ref, *, scale):
    _sdpa_kernel(q_ref, k_ref, v_ref, ctx_ref, None, scale=scale)


# ---------------------------------------------------------------------------
# Tiling / VMEM planning
# ---------------------------------------------------------------------------
def _vmem_capacity_bytes() -> int:
    try:
        cap = int(pltpu.get_tpu_info().vmem_capacity_bytes)
        if cap > 0:
            return cap
    except Exception:
        pass
    return 64 * 1024 * 1024  # conservative (v7x per-TC VMEM)


def _plan_tiles(S, D, in_it, ctx_it, attn_it, materialize_attn, vmem_cap):
    """Pick the q-tile size and a scoped-VMEM limit from the actual budget."""
    # K + V resident slabs; planned as double-buffered (conservative — the
    # Buffered(1) specs only use half of this).
    kv_bytes = 2 * 2 * S * D * in_it
    # Per q-row bytes: q in (2x), ctx out (2x), f32 scores + e temporaries,
    # and (optionally) the double-buffered attn output slab.
    per_row = 2 * D * in_it + 2 * D * ctx_it + 2 * S * 4
    if materialize_attn:
        per_row += 2 * S * attn_it

    if S <= 1024:
        tq = S
    else:
        budget = int(vmem_cap * 0.7)          # headroom for compiler internals
        avail = max(budget - kv_bytes, 0)
        tq = 128
        for cand in (1024, 512, 256, 128):
            if cand <= S and cand * per_row <= avail:
                tq = cand
                break
        # TODO(synk): when even TQ=128 does not fit (very large S * d_model),
        # tile the KV axis with an online-softmax accumulator instead of
        # keeping K/V fully resident.

    need = kv_bytes + tq * per_row
    vmem_limit = int(need * 5 // 4) + (4 << 20)
    vmem_limit = max(vmem_limit, 32 << 20)
    vmem_limit = min(vmem_limit, max(vmem_cap - (8 << 20), 32 << 20))
    return tq, vmem_limit


# ---------------------------------------------------------------------------
# pallas_call builder
# ---------------------------------------------------------------------------
def _call(query, key, value, *, scale, tq, return_attention, attn_dtype,
          vmem_limit, buffered_kv):
    B, S, D = query.shape
    n_q = pl.cdiv(S, tq)

    q_spec = pl.BlockSpec((1, tq, D), lambda b, qi: (b, qi, 0))
    ctx_spec = pl.BlockSpec((1, tq, D), lambda b, qi: (b, qi, 0))
    kv_index = lambda b, qi: (b, 0, 0)        # resident across the qi axis
    if buffered_kv:
        # Block index is constant along qi -> single buffer, one DMA per batch.
        kv_spec = pl.BlockSpec((1, S, D), kv_index, pipeline_mode=pl.Buffered(1))
    else:
        kv_spec = pl.BlockSpec((1, S, D), kv_index)

    in_it = jnp.dtype(query.dtype).itemsize
    ctx_dtype = query.dtype

    if return_attention:
        kernel = partial(_sdpa_kernel, scale=scale)
        out_shape = (
            jax.ShapeDtypeStruct((B, S, D), ctx_dtype),   # context
            jax.ShapeDtypeStruct((B, S, S), attn_dtype),  # attention weights
        )
        out_specs = [ctx_spec,
                     pl.BlockSpec((1, tq, S), lambda b, qi: (b, qi, 0))]
        bytes_out = B * S * D * in_it + B * S * S * jnp.dtype(attn_dtype).itemsize
    else:
        kernel = partial(_sdpa_ctx_only_kernel, scale=scale)
        out_shape = jax.ShapeDtypeStruct((B, S, D), ctx_dtype)
        out_specs = ctx_spec
        bytes_out = B * S * D * in_it

    cost = pl.CostEstimate(
        flops=4 * B * S * S * D,
        transcendentals=B * S * S,
        bytes_accessed=3 * B * S * D * in_it + bytes_out,
    )

    # TODO(synk): on v7x with B == 1 verify the qi axis is actually split
    # across the 2 TensorCores; if not, add an explicit leading core axis.
    return pl.pallas_call(
        kernel,
        out_shape=out_shape,
        grid_spec=pltpu.PrefetchScalarGridSpec(
            num_scalar_prefetch=0,
            grid=(B, n_q),
            in_specs=[q_spec, kv_spec, kv_spec],
            out_specs=out_specs,
        ),
        compiler_params=pltpu.CompilerParams(
            dimension_semantics=("parallel", "parallel"),
            vmem_limit_bytes=vmem_limit,
        ),
        cost_estimate=cost,
    )(query, key, value)


# ---------------------------------------------------------------------------
# Public wrapper
# ---------------------------------------------------------------------------
def scaled_dot_product_attention(query, key, value, d_k: int = 0, *,
                                 return_attention: bool = True,
                                 attn_dtype=None):
    """Pallas equivalent of ScaledDotProductAttention.forward with mask=None
    and dropout_p=None.

    Returns (context, attention) by default; with return_attention=False only
    the context is computed (skips the dominant B*S^2 HBM writeback).
    attn_dtype lets callers request e.g. bfloat16 attention weights
    independently of query.dtype (halves the attention writeback).
    """
    B, S, D = query.shape
    assert key.shape == (B, S, D) and value.shape == (B, S, D)
    # TODO(synk): the 2-D [batch, d_model] input variant of the module is not
    # implemented here.

    scale = 1.0 / math.sqrt(D if d_k == 0 else d_k)

    # Pad d_model to a multiple of 128: full MXU contraction width and
    # unmasked lane-dense ctx stores.  Exact: zero-padded K columns add 0 to
    # QK^T and zero-padded V columns produce 0 ctx columns that are sliced off.
    d_pad = ((D + 127) // 128) * 128
    if d_pad != D:
        pad = ((0, 0), (0, 0), (0, d_pad - D))
        query = jnp.pad(query, pad)
        key = jnp.pad(key, pad)
        value = jnp.pad(value, pad)
    # TODO(synk): for S not a multiple of 128, pad S caller-side (with key
    # masking) to keep the (TQ, S) attention store fully lane-dense.

    ctx_dtype = query.dtype
    attn_dtype = query.dtype if attn_dtype is None else jnp.dtype(attn_dtype)

    tq, vmem_limit = _plan_tiles(
        S, d_pad,
        in_it=jnp.dtype(query.dtype).itemsize,
        ctx_it=jnp.dtype(ctx_dtype).itemsize,
        attn_it=jnp.dtype(attn_dtype).itemsize,
        materialize_attn=return_attention,
        vmem_cap=_vmem_capacity_bytes(),
    )

    kwargs = dict(scale=scale, tq=tq, return_attention=return_attention,
                  attn_dtype=attn_dtype, vmem_limit=vmem_limit)
    try:
        outs = _call(query, key, value, buffered_kv=True, **kwargs)
        outs = jax.block_until_ready(outs)
    except Exception:
        # Fallback if single-buffered (pl.Buffered(1)) K/V specs are rejected.
        outs = _call(query, key, value, buffered_kv=False, **kwargs)

    if return_attention:
        context, attention = outs
    else:
        context, attention = outs, None
    if d_pad != D:
        context = context[..., :D]
    return (context, attention) if return_attention else context


# ---------------------------------------------------------------------------
# Self-test
# ---------------------------------------------------------------------------
if __name__ == "__main__":
    # Small shapes consistent with the module: [batch, seq_len, d_model]
    B, S, D = 2, 8, 32
    key0 = jax.random.PRNGKey(0)
    kq, kk, kv = jax.random.split(key0, 3)
    q = jax.random.normal(kq, (B, S, D), dtype=jnp.float32)
    k = jax.random.normal(kk, (B, S, D), dtype=jnp.float32)
    v = jax.random.normal(kv, (B, S, D), dtype=jnp.float32)

    context, attention = scaled_dot_product_attention(q, k, v, d_k=0)
    jax.block_until_ready((context, attention))

    # Pure-JAX reference of the PyTorch semantics (exact f32 matmuls).
    scores_ref = jnp.einsum("bqd,bkd->bqk", q, k,
                            precision=lax.Precision.HIGHEST) / jnp.sqrt(jnp.float32(D))
    attn_ref = jax.nn.softmax(scores_ref, axis=-1)
    ctx_ref = jnp.einsum("bqk,bkd->bqd", attn_ref, v,
                         precision=lax.Precision.HIGHEST)

    assert context.shape == (B, S, D) and attention.shape == (B, S, S)
    assert jnp.allclose(attention, attn_ref, atol=1e-4, rtol=1e-4)
    assert jnp.allclose(context, ctx_ref, atol=1e-4, rtol=1e-4)
    # Exact softmax division -> rows sum to 1 up to f32 rounding.
    assert jnp.allclose(jnp.sum(attention, axis=-1), 1.0, atol=1e-5)

    # Fast path: context only (no B*S^2 attention writeback).
    ctx_only = scaled_dot_product_attention(q, k, v, d_k=0,
                                            return_attention=False)
    jax.block_until_ready(ctx_only)
    assert jnp.allclose(ctx_only, ctx_ref, atol=1e-4, rtol=1e-4)

    print("KERNEL_OK")
</pallas_src>

<mosaic_0001>
module attributes {stable_mosaic.version = 11 : i64} {
  func.func @_sdpa_kernel(%arg0: i32, %arg1: i32, %arg2: memref<1x8x128xf32, #tpu.memory_space<vmem>>, %arg3: memref<1x8x128xf32, #tpu.memory_space<vmem>>, %arg4: memref<1x8x128xf32, #tpu.memory_space<vmem>>, %arg5: memref<1x8x128xf32, #tpu.memory_space<vmem>>, %arg6: memref<1x8x8xf32, #tpu.memory_space<vmem>>) attributes {dimension_semantics = [#tpu.dimension_semantics<parallel>, #tpu.dimension_semantics<parallel>], iteration_bounds = array<i64: 2, 1>, scalar_prefetch = 0 : i64, scratch_operands = 0 : i64, tpu.core_type = #tpu.core_type<tc>, window_params = [{transform_indices = @transform_0, window_bounds = array<i64: 1, 8, 128>}, {pipeline_mode = #tpu.pipeline_mode<synchronous>, transform_indices = @transform_1, window_bounds = array<i64: 1, 8, 128>}, {pipeline_mode = #tpu.pipeline_mode<synchronous>, transform_indices = @transform_2, window_bounds = array<i64: 1, 8, 128>}, {transform_indices = @transform_3, window_bounds = array<i64: 1, 8, 128>}, {transform_indices = @transform_4, window_bounds = array<i64: 1, 8, 8>}]} {
    %c0 = arith.constant 0 : index
    %c0_0 = arith.constant 0 : index
    %c0_1 = arith.constant 0 : index
    %0 = vector.load %arg2[%c0, %c0_0, %c0_1] : memref<1x8x128xf32, #tpu.memory_space<vmem>>, vector<1x8x128xf32>
    %1 = vector.shape_cast %0 : vector<1x8x128xf32> to vector<8x128xf32>
    %c0_2 = arith.constant 0 : index
    %c0_3 = arith.constant 0 : index
    %c0_4 = arith.constant 0 : index
    %2 = vector.load %arg3[%c0_2, %c0_3, %c0_4] : memref<1x8x128xf32, #tpu.memory_space<vmem>>, vector<1x8x128xf32>
    %3 = vector.shape_cast %2 : vector<1x8x128xf32> to vector<8x128xf32>
    %c0_5 = arith.constant 0 : index
    %c0_6 = arith.constant 0 : index
    %c0_7 = arith.constant 0 : index
    %4 = vector.load %arg4[%c0_5, %c0_6, %c0_7] : memref<1x8x128xf32, #tpu.memory_space<vmem>>, vector<1x8x128xf32>
    %5 = vector.shape_cast %4 : vector<1x8x128xf32> to vector<8x128xf32>
    %cst = arith.constant 0.176776692 : f32
    %6 = vector.broadcast %cst : f32 to vector<8x128xf32>
    %7 = arith.mulf %1, %6 : vector<8x128xf32>
    %cst_8 = arith.constant dense<0.000000e+00> : vector<8x8xf32>
    %8 = tpu.matmul %7, %3, %cst_8 {dimension_numbers = #tpu.dot_dimension_numbers<[1], [1], [0], [0], [0, 0, 1, 0], [], []>} : vector<8x128xf32>, vector<8x128xf32>, vector<8x8xf32> -> vector<8x8xf32>
    %cst_9 = arith.constant dense<0xFF800000> : vector<8xf32>
    %9 = vector.multi_reduction <maximumf>, %8, %cst_9 [1] : vector<8x8xf32> to vector<8xf32>
    %10 = vector.shape_cast %9 : vector<8xf32> to vector<8x1xf32>
    %11 = vector.broadcast %10 : vector<8x1xf32> to vector<8x8xf32>
    %12 = arith.subf %8, %11 : vector<8x8xf32>
    %13 = math.exp %12 : vector<8x8xf32>
    %cst_10 = arith.constant dense<0.000000e+00> : vector<8xf32>
    %14 = vector.multi_reduction <add>, %13, %cst_10 [1] : vector<8x8xf32> to vector<8xf32>
    %15 = vector.shape_cast %14 : vector<8xf32> to vector<8x1xf32>
    %16 = vector.broadcast %15 : vector<8x1xf32> to vector<8x8xf32>
    %17 = arith.divf %13, %16 : vector<8x8xf32>
    %cst_11 = arith.constant dense<0.000000e+00> : vector<8x128xf32>
    %18 = tpu.matmul %17, %5, %cst_11 {dimension_numbers = #tpu.dot_dimension_numbers<[1], [0], [0], [1], [0, 0, 1, 1], [], []>} : vector<8x8xf32>, vector<8x128xf32>, vector<8x128xf32> -> vector<8x128xf32>
    %c0_12 = arith.constant 0 : index
    %c0_13 = arith.constant 0 : index
    %c0_14 = arith.constant 0 : index
    %19 = vector.load %arg5[%c0_12, %c0_13, %c0_14] : memref<1x8x128xf32, #tpu.memory_space<vmem>>, vector<1x8x128xf32>
    %20 = vector.shape_cast %19 : vector<1x8x128xf32> to vector<8x128xf32>
    %21 = vector.shape_cast %18 : vector<8x128xf32> to vector<1x8x128xf32>
    tpu.vector_store %arg5[%c0_12, %c0_13, %c0_14], %21 {strides = array<i32>} : memref<1x8x128xf32, #tpu.memory_space<vmem>>, vector<1x8x128xf32>,
    %c0_15 = arith.constant 0 : index
    %c0_16 = arith.constant 0 : index
    %c0_17 = arith.constant 0 : index
    %22 = vector.load %arg6[%c0_15, %c0_16, %c0_17] : memref<1x8x8xf32, #tpu.memory_space<vmem>>, vector<1x8x8xf32>
    %23 = vector.shape_cast %22 : vector<1x8x8xf32> to vector<8x8xf32>
    %24 = vector.shape_cast %17 : vector<8x8xf32> to vector<1x8x8xf32>
    tpu.vector_store %arg6[%c0_15, %c0_16, %c0_17], %24 {strides = array<i32>} : memref<1x8x8xf32, #tpu.memory_space<vmem>>, vector<1x8x8xf32>,
    return
  }
  func.func @transform_0(%arg0: i32, %arg1: i32) -> (i32, i32, i32) {
    %c0_i32 = arith.constant 0 : i32
    %c0_i32_0 = arith.constant 0 : i32
    return %arg0, %arg1, %c0_i32 : i32, i32, i32
  }
  func.func @transform_1(%arg0: i32, %arg1: i32) -> (i32, i32, i32) {
    %c0_i32 = arith.constant 0 : i32
    %c0_i32_0 = arith.constant 0 : i32
    %c0_i32_1 = arith.constant 0 : i32
    return %arg0, %c0_i32, %c0_i32_0 : i32, i32, i32
  }
  func.func @transform_2(%arg0: i32, %arg1: i32) -> (i32, i32, i32) {
    %c0_i32 = arith.constant 0 : i32
    %c0_i32_0 = arith.constant 0 : i32
    %c0_i32_1 = arith.constant 0 : i32
    return %arg0, %c0_i32, %c0_i32_0 : i32, i32, i32
  }
  func.func @transform_3(%arg0: i32, %arg1: i32) -> (i32, i32, i32) {
    %c0_i32 = arith.constant 0 : i32
    %c0_i32_0 = arith.constant 0 : i32
    return %arg0, %arg1, %c0_i32 : i32, i32, i32
  }
  func.func @transform_4(%arg0: i32, %arg1: i32) -> (i32, i32, i32) {
    %c0_i32 = arith.constant 0 : i32
    %c0_i32_0 = arith.constant 0 : i32
    return %arg0, %arg1, %c0_i32 : i32, i32, i32
  }
}

module attributes {stable_mosaic.version = 11 : i64} {
  func.func @_sdpa_kernel(%arg0: i32, %arg1: i32, %arg2: memref<1x8x128xf32, #tpu.memory_space<vmem>>, %arg3: memref<1x8x128xf32, #tpu.memory_space<vmem>>, %arg4: memref<1x8x128xf32, #tpu.memory_space<vmem>>, %arg5: memref<1x8x128xf32, #tpu.memory_space<vmem>>, %arg6: memref<1x8x8xf32, #tpu.memory_space<vmem>>) attributes {dimension_semantics = [#tpu.dimension_semantics<parallel>, #tpu.dimension_semantics<parallel>], iteration_bounds = array<i64: 2, 1>, scalar_prefetch = 0 : i64, scratch_operands = 0 : i64, tpu.core_type = #tpu.core_type<tc>, window_params = [{transform_indices = @transform_0, window_bounds = array<i64: 1, 8, 128>}, {transform_indices = @transform_1, window_bounds = array<i64: 1, 8, 128>}, {transform_indices = @transform_2, window_bounds = array<i64: 1, 8, 128>}, {transform_indices = @transform_3, window_bounds = array<i64: 1, 8, 128>}, {transform_indices = @transform_4, window_bounds = array<i64: 1, 8, 8>}]} {
    %c0 = arith.constant 0 : index
    %c0_0 = arith.constant 0 : index
    %c0_1 = arith.constant 0 : index
    %0 = vector.load %arg2[%c0, %c0_0, %c0_1] : memref<1x8x128xf32, #tpu.memory_space<vmem>>, vector<1x8x128xf32>
    %1 = vector.shape_cast %0 : vector<1x8x128xf32> to vector<8x128xf32>
    %c0_2 = arith.constant 0 : index
    %c0_3 = arith.constant 0 : index
    %c0_4 = arith.constant 0 : index
    %2 = vector.load %arg3[%c0_2, %c0_3, %c0_4] : memref<1x8x128xf32, #tpu.memory_space<vmem>>, vector<1x8x128xf32>
    %3 = vector.shape_cast %2 : vector<1x8x128xf32> to vector<8x128xf32>
    %c0_5 = arith.constant 0 : index
    %c0_6 = arith.constant 0 : index
    %c0_7 = arith.constant 0 : index
    %4 = vector.load %arg4[%c0_5, %c0_6, %c0_7] : memref<1x8x128xf32, #tpu.memory_space<vmem>>, vector<1x8x128xf32>
    %5 = vector.shape_cast %4 : vector<1x8x128xf32> to vector<8x128xf32>
    %cst = arith.constant 0.176776692 : f32
    %6 = vector.broadcast %cst : f32 to vector<8x128xf32>
    %7 = arith.mulf %1, %6 : vector<8x128xf32>
    %cst_8 = arith.constant dense<0.000000e+00> : vector<8x8xf32>
    %8 = tpu.matmul %7, %3, %cst_8 {dimension_numbers = #tpu.dot_dimension_numbers<[1], [1], [0], [0], [0, 0, 1, 0], [], []>} : vector<8x128xf32>, vector<8x128xf32>, vector<8x8xf32> -> vector<8x8xf32>
    %cst_9 = arith.constant dense<0xFF800000> : vector<8xf32>
    %9 = vector.multi_reduction <maximumf>, %8, %cst_9 [1] : vector<8x8xf32> to vector<8xf32>
    %10 = vector.shape_cast %9 : vector<8xf32> to vector<8x1xf32>
    %11 = vector.broadcast %10 : vector<8x1xf32> to vector<8x8xf32>
    %12 = arith.subf %8, %11 : vector<8x8xf32>
    %13 = math.exp %12 : vector<8x8xf32>
    %cst_10 = arith.constant dense<0.000000e+00> : vector<8xf32>
    %14 = vector.multi_reduction <add>, %13, %cst_10 [1] : vector<8x8xf32> to vector<8xf32>
    %15 = vector.shape_cast %14 : vector<8xf32> to vector<8x1xf32>
    %16 = vector.broadcast %15 : vector<8x1xf32> to vector<8x8xf32>
    %17 = arith.divf %13, %16 : vector<8x8xf32>
    %cst_11 = arith.constant dense<0.000000e+00> : vector<8x128xf32>
    %18 = tpu.matmul %17, %5, %cst_11 {dimension_numbers = #tpu.dot_dimension_numbers<[1], [0], [0], [1], [0, 0, 1, 1], [], []>} : vector<8x8xf32>, vector<8x128xf32>, vector<8x128xf32> -> vector<8x128xf32>
    %c0_12 = arith.constant 0 : index
    %c0_13 = arith.constant 0 : index
    %c0_14 = arith.constant 0 : index
    %19 = vector.load %arg5[%c0_12, %c0_13, %c0_14] : memref<1x8x128xf32, #tpu.memory_space<vmem>>, vector<1x8x128xf32>
    %20 = vector.shape_cast %19 : vector<1x8x128xf32> to vector<8x128xf32>
    %21 = vector.shape_cast %18 : vector<8x128xf32> to vector<1x8x128xf32>
    tpu.vector_store %arg5[%c0_12, %c0_13, %c0_14], %21 {strides = array<i32>} : memref<1x8x128xf32, #tpu.memory_space<vmem>>, vector<1x8x128xf32>,
    %c0_15 = arith.constant 0 : index
    %c0_16 = arith.constant 0 : index
    %c0_17 = arith.constant 0 : index
    %22 = vector.load %arg6[%c0_15, %c0_16, %c0_17] : memref<1x8x8xf32, #tpu.memory_space<vmem>>, vector<1x8x8xf32>
    %23 = vector.shape_cast %22 : vector<1x8x8xf32> to vector<8x8xf32>
    %24 = vector.shape_cast %17 : vector<8x8xf32> to vector<1x8x8xf32>
    tpu.vector_store %arg6[%c0_15, %c0_16, %c0_17], %24 {strides = array<i32>} : memref<1x8x8xf32, #tpu.memory_space<vmem>>, vector<1x8x8xf32>,
    return
  }
  func.func @transform_0(%arg0: i32, %arg1: i32) -> (i32, i32, i32) {
    %c0_i32 = arith.constant 0 : i32
    %c0_i32_0 = arith.constant 0 : i32
    return %arg0, %arg1, %c0_i32 : i32, i32, i32
  }
  func.func @transform_1(%arg0: i32, %arg1: i32) -> (i32, i32, i32) {
    %c0_i32 = arith.constant 0 : i32
    %c0_i32_0 = arith.constant 0 : i32
    %c0_i32_1 = arith.constant 0 : i32
    return %arg0, %c0_i32, %c0_i32_0 : i32, i32, i32
  }
  func.func @transform_2(%arg0: i32, %arg1: i32) -> (i32, i32, i32) {
    %c0_i32 = arith.constant 0 : i32
    %c0_i32_0 = arith.constant 0 : i32
    %c0_i32_1 = arith.constant 0 : i32
    return %arg0, %c0_i32, %c0_i32_0 : i32, i32, i32
  }
  func.func @transform_3(%arg0: i32, %arg1: i32) -> (i32, i32, i32) {
    %c0_i32 = arith.constant 0 : i32
    %c0_i32_0 = arith.constant 0 : i32
    return %arg0, %arg1, %c0_i32 : i32, i32, i32
  }
  func.func @transform_4(%arg0: i32, %arg1: i32) -> (i32, i32, i32) {
    %c0_i32 = arith.constant 0 : i32
    %c0_i32_0 = arith.constant 0 : i32
    return %arg0, %arg1, %c0_i32 : i32, i32, i32
  }
}

</mosaic_0001>

<llo_original>
// kernel: tpu_custom_call.1
$region0: #{tpu_custom_call.1}
  #allocation0 [shape = 'u32[]', space=smem, size = 0x4, offset = 0x4, fixed_abs, tag = 'smem constant byte address 0x4 - core index']
  #allocation1 [shape = 'u32[72,128]{1,0:T(1,128)}', space=vmem, size = 0x9000, scoped, tag = 'internal scratch']
  %s0 = inlined_call_operand.hbm [shape: f32[2,8,128], index: 0, kind: input, shape index: {}]
  %s1 = inlined_call_operand.hbm [shape: f32[2,8,128], index: 1, kind: input, shape index: {}]
  %s2 = inlined_call_operand.hbm [shape: f32[2,8,128], index: 2, kind: input, shape index: {}]
  %s3 = inlined_call_operand.hbm [shape: f32[2,8,128], index: 3, kind: output, shape index: {0}]
  %s4 = inlined_call_operand.hbm [shape: f32[2,8,8], index: 4, kind: output, shape index: {1}]
  %5 = xla_tuple %s3, %s4
  %s6 = sld [smem:[#allocation0]]
  $region65: #{tpu_custom_call.1} parent=0
    _
  %s8 = ssub.s32 1, %s6
  %s9 = scalar_select 0, %s8, %s6
  $region1: #{tpu_custom_call.1} parent=0
    #allocation2 [shape = 'u8[8192]{0}', space=vmem, size = 0x2000, scoped, tag = 'input window, operand 0']
    #allocation3 [shape = 's32[2]{0}', space=sflag, size = 0x8, scoped, tag = 'scoped memory for tpu_custom_call.1']
    #allocation4 [shape = 's32[2]{0}', space=sflag, size = 0x8, scoped, tag = 'scoped memory for tpu_custom_call.1']
    #allocation5 [shape = 'u8[4096]{0}', space=vmem, size = 0x1000, scoped, tag = 'input window, operand 1, single buffered']
    #allocation6 [shape = 's32[1]{0}', space=sflag, size = 0x4, scoped, tag = 'scoped memory for tpu_custom_call.1']
    #allocation7 [shape = 'u8[4096]{0}', space=vmem, size = 0x1000, scoped, tag = 'input window, operand 2, single buffered']
    #allocation8 [shape = 'u8[8192]{0}', space=vmem, size = 0x2000, scoped, tag = 'output window, operand 0']
    #allocation9 [shape = 'u8[8192]{0}', space=vmem, size = 0x2000, scoped, tag = 'output window, operand 1']
    #allocation10 [shape = 's32[2]{0}', space=sflag, size = 0x8, scoped, tag = 'scoped memory for tpu_custom_call.1']
    %10 = vsyncpa [#allocation3], 0
    %s11 = scalar_lea.sflag [#allocation3], 1
    %12 = vsyncpa %s11, 0
    %13 = vsyncpa [#allocation6], 0
    %14 = vsyncpa [#allocation4], 0
    %s15 = scalar_lea.sflag [#allocation4], 1
    %16 = vsyncpa %s15, 0
    %17 = vsyncpa [#allocation10], 0
    %s18 = scalar_lea.sflag [#allocation10], 1
    %19 = vsyncpa %s18, 0
    loop: start=0, step=1, limit=4
    $region2: #{tpu_custom_call.1} parent=1 // loop_pre_header
      _
    $region3: #{tpu_custom_call.1} parent=1 // loop_header
      %s21 = sphi 0, %s25
      %p22 = scmp.ge.s32.totalorder %s21, 4
      %s28 = sphi 0, %s40
      %s29 = sphi 0, %s36
      %s30 = sphi 0, %s28
      %s31 = sphi 0, %s29
      %s32 = sphi 0, %s30
      %s33 = sphi 0, %s31
      %s45 = sphi 0, %s47
      %s48 = sphi 0, %s45
      %s49 = sphi 0, %s48
      %s65 = sphi 0, %s49
      %s71 = sphi 0, %s73
      %s74 = sphi 0, %s71
      %s75 = sphi 0, %s74
      %s91 = sphi 0, %s75
      %s97 = sphi 0, %s99
      %s100 = sphi 0, %s97
      %s101 = sphi 0, %s100
      %s117 = sphi 0, %s101
      %s125 = sphi 0, %s127
      %s128 = sphi 0, %s125
      %s129 = sphi 0, %s128
      %s145 = sphi 0, %s129
      %s153 = sphi 0, %s155
      %s156 = sphi 0, %s153
      %s157 = sphi 0, %s156
      %s173 = sphi 0, %s157
    $region4: #{tpu_custom_call.1} parent=1 // loop_header_branch
      %24 = sbr.rel (%p22) target = $region8
    $region5: #{tpu_custom_call.1} parent=1 // loop_body
      %s26 = ssub.s32 %s21, 1
      %s27 = ssub.s32 %s21, 2
      %s34 = sadd.s32 1, %s29
      %p35 = scmp.ge.s32.totalorder %s34, 1
      %s36 = scalar_select %p35, 0, %s34
      %s37 = sadd.s32 1, %s28
      %s38 = scalar_select %p35, %s37, %s28
      %p39 = scmp.ge.s32.totalorder %s38, 2
      %s40 = scalar_select %p39, 0, %s38
      %s41 = ssub.s32 %s28, %s40
      %s42 = ssub.s32 %s29, %s36
      %s43 = sor.u32 %s41, %s42
      %p44 = scmp.eq.s32.totalorder %s43, 0
      %s46 = sadd.s32 %s45, 1
      %s47 = scalar_select %p44, %s45, %s46
      %p50 = pneg %p44
      %p51 = scmp.eq.s32.totalorder %s21, 1
      %p52 = por %p50, %p51
      %p53 = scmp.ne.s32.totalorder %s45, %s48
      %p54 = scmp.eq.s32.totalorder %s21, 0
      %p55 = por %p53, %p54
      %p56 = scmp.ne.s32.totalorder %s45, %s48
      %p57 = scmp.eq.s32.totalorder %s26, 1
      %p58 = por %p56, %p57
      %p59 = scmp.ne.s32.totalorder %s48, %s49
      %p60 = scmp.eq.s32.totalorder %s26, 0
      %p61 = por %p59, %p60
      %p62 = scmp.ne.s32.totalorder %s48, %s49
      %p63 = scmp.eq.s32.totalorder %s27, 1
      %p64 = por %p62, %p63
      %p66 = scmp.ne.s32.totalorder %s49, %s65
      %p67 = scmp.eq.s32.totalorder %s27, 0
      %p68 = por %p66, %p67
      %s69 = ssub.s32 %s28, %s40
      %p70 = scmp.eq.s32.totalorder %s69, 0
      %s72 = sadd.s32 %s71, 1
      %s73 = scalar_select %p70, %s71, %s72
      %p76 = pneg %p70
      %p77 = scmp.eq.s32.totalorder %s21, 1
      %p78 = por %p76, %p77
      %p79 = scmp.ne.s32.totalorder %s71, %s74
      %p80 = scmp.eq.s32.totalorder %s21, 0
      %p81 = por %p79, %p80
      %p82 = scmp.ne.s32.totalorder %s71, %s74
      %p83 = scmp.eq.s32.totalorder %s26, 1
      %p84 = por %p82, %p83
      %p85 = scmp.ne.s32.totalorder %s74, %s75
      %p86 = scmp.eq.s32.totalorder %s26, 0
      %p87 = por %p85, %p86
      %p88 = scmp.ne.s32.totalorder %s74, %s75
      %p89 = scmp.eq.s32.totalorder %s27, 1
      %p90 = por %p88, %p89
      %p92 = scmp.ne.s32.totalorder %s75, %s91
      %p93 = scmp.eq.s32.totalorder %s27, 0
      %p94 = por %p92, %p93
      %s95 = ssub.s32 %s28, %s40
      %p96 = scmp.eq.s32.totalorder %s95, 0
      %s98 = sadd.s32 %s97, 1
      %s99 = scalar_select %p96, %s97, %s98
      %p102 = pneg %p96
      %p103 = scmp.eq.s32.totalorder %s21, 1
      %p104 = por %p102, %p103
      %p105 = scmp.ne.s32.totalorder %s97, %s100
      %p106 = scmp.eq.s32.totalorder %s21, 0
      %p107 = por %p105, %p106
      %p108 = scmp.ne.s32.totalorder %s97, %s100
      %p109 = scmp.eq.s32.totalorder %s26, 1
      %p110 = por %p108, %p109
      %p111 = scmp.ne.s32.totalorder %s100, %s101
      %p112 = scmp.eq.s32.totalorder %s26, 0
      %p113 = por %p111, %p112
      %p114 = scmp.ne.s32.totalorder %s100, %s101
      %p115 = scmp.eq.s32.totalorder %s27, 1
      %p116 = por %p114, %p115
      %p118 = scmp.ne.s32.totalorder %s101, %s117
      %p119 = scmp.eq.s32.totalorder %s27, 0
      %p120 = por %p118, %p119
      %s121 = ssub.s32 %s28, %s40
      %s122 = ssub.s32 %s29, %s36
      %s123 = sor.u32 %s121, %s122
      %p124 = scmp.eq.s32.totalorder %s123, 0
      %s126 = sadd.s32 %s125, 1
      %s127 = scalar_select %p124, %s125, %s126
      %p130 = pneg %p124
      %p131 = scmp.eq.s32.totalorder %s21, 1
      %p132 = por %p130, %p131
      %p133 = scmp.ne.s32.totalorder %s125, %s128
      %p134 = scmp.eq.s32.totalorder %s21, 0
      %p135 = por %p133, %p134
      %p136 = scmp.ne.s32.totalorder %s125, %s128
      %p137 = scmp.eq.s32.totalorder %s26, 1
      %p138 = por %p136, %p137
      %p139 = scmp.ne.s32.totalorder %s128, %s129
      %p140 = scmp.eq.s32.totalorder %s26, 0
      %p141 = por %p139, %p140
      %p142 = scmp.ne.s32.totalorder %s128, %s129
      %p143 = scmp.eq.s32.totalorder %s27, 1
      %p144 = por %p142, %p143
      %p146 = scmp.ne.s32.totalorder %s129, %s145
      %p147 = scmp.eq.s32.totalorder %s27, 0
      %p148 = por %p146, %p147
      %s149 = ssub.s32 %s28, %s40
      %s150 = ssub.s32 %s29, %s36
      %s151 = sor.u32 %s149, %s150
      %p152 = scmp.eq.s32.totalorder %s151, 0
      %s154 = sadd.s32 %s153, 1
      %s155 = scalar_select %p152, %s153, %s154
      %p158 = pneg %p152
      %p159 = scmp.eq.s32.totalorder %s21, 1
      %p160 = por %p158, %p159
      %p161 = scmp.ne.s32.totalorder %s153, %s156
      %p162 = scmp.eq.s32.totalorder %s21, 0
      %p163 = por %p161, %p162
      %p164 = scmp.ne.s32.totalorder %s153, %s156
      %p165 = scmp.eq.s32.totalorder %s26, 1
      %p166 = por %p164, %p165
      %p167 = scmp.ne.s32.totalorder %s156, %s157
      %p168 = scmp.eq.s32.totalorder %s26, 0
      %p169 = por %p167, %p168
      %p170 = scmp.ne.s32.totalorder %s156, %s157
      %p171 = scmp.eq.s32.totalorder %s27, 1
      %p172 = por %p170, %p171
      %p174 = scmp.ne.s32.totalorder %s157, %s173
      %p175 = scmp.eq.s32.totalorder %s27, 0
      %p176 = por %p174, %p175
      %p177 = scmp.le.s32.totalorder 1, %s21
      %p178 = scmp.lt.s32.totalorder %s21, 3
      %p179 = pnand %p177, %p178
      %p180 = pneg %p179
      // Predicated region
      $region9: #{tpu_custom_call.1} parent=5 // pred_check
        _
      $region10: #{tpu_custom_call.1} parent=5 // pred_check_branch
        %182 = sbr.rel (%p179) target = $region12
      $region11: #{tpu_custom_call.1} parent=5 // pred_region
        %s183 = ssub.s32 %s21, 1
        // Predicated region
        $region13: #{tpu_custom_call.1} parent=11 // pred_check
          %p184 = pneg %p87
        $region14: #{tpu_custom_call.1} parent=11 // pred_check_branch
          %186 = sbr.rel (%p184) target = $region16
        $region15: #{tpu_custom_call.1} parent=11 // pred_region
          %188 = vsyncadd [#allocation6], 0
          %s189 = smul.addr %s30, 8
          %s190 = scalar_lea.hbm %s1, %s189
          %s192 = sshll.u32 %s190, 4
          %s193 = int_to_ptr.hbm [resolvable:$true] %s192
          %s194 = sshll.u32 [#allocation5], 4
          %s195 = int_to_ptr.vmem [resolvable:$true] %s194
          %197 = dma.hbm_to_vmem [thread:$0]  %s193, 128, %s195, [#allocation6]
        $region16: #{tpu_custom_call.1} parent=11 // pred_fallthru
          _
        // Predicated region
        $region17: #{tpu_custom_call.1} parent=11 // pred_check
          %p198 = pneg %p113
        $region18: #{tpu_custom_call.1} parent=11 // pred_check_branch
          %200 = sbr.rel (%p198) target = $region20
        $region19: #{tpu_custom_call.1} parent=11 // pred_region
          %202 = vsyncadd [#allocation6], 0
          %s203 = smul.addr %s30, 8
          %s204 = scalar_lea.hbm %s2, %s203
          %s206 = sshll.u32 %s204, 4
          %s207 = int_to_ptr.hbm [resolvable:$true] %s206
          %s208 = sshll.u32 [#allocation7], 4
          %s209 = int_to_ptr.vmem [resolvable:$true] %s208
          %211 = dma.hbm_to_vmem [thread:$0]  %s207, 128, %s209, [#allocation6]
        $region20: #{tpu_custom_call.1} parent=11 // pred_fallthru
          _
      $region12: #{tpu_custom_call.1} parent=5 // pred_fallthru
        _
      %p212 = scmp.lt.s32.totalorder %s21, 2
      // Predicated region
      $region21: #{tpu_custom_call.1} parent=5 // pred_check
        %p213 = pneg %p212
      $region22: #{tpu_custom_call.1} parent=5 // pred_check_branch
        %215 = sbr.rel (%p213) target = $region24
      $region23: #{tpu_custom_call.1} parent=5 // pred_region
        // Predicated region
        $region25: #{tpu_custom_call.1} parent=23 // pred_check
          %p216 = pneg %p55
        $region26: #{tpu_custom_call.1} parent=23 // pred_check_branch
          %218 = sbr.rel (%p216) target = $region28
        $region27: #{tpu_custom_call.1} parent=23 // pred_region
          %s219 = sand.u32 %s45, 1
          %s220 = scalar_lea.sflag [#allocation3], %s219
          %s221 = sand.u32 %s45, 1
          %s222 = smul.addr %s221, 8
          %s223 = scalar_lea.vmem [#allocation2], %s222
          %225 = vsyncadd %s220, 0
          %s226 = sadd.s32 %s29, %s28
          %s227 = smul.addr %s226, 8
          %s228 = scalar_lea.hbm %s0, %s227
          %s230 = sshll.u32 %s228, 4
          %s231 = int_to_ptr.hbm [resolvable:$true] %s230
          %s232 = sshll.u32 %s223, 4
          %s233 = int_to_ptr.vmem [resolvable:$true] %s232
          %235 = dma.hbm_to_vmem [thread:$0]  %s231, 128, %s233, %s220
        $region28: #{tpu_custom_call.1} parent=23 // pred_fallthru
          _
      $region24: #{tpu_custom_call.1} parent=5 // pred_fallthru
        _
      %p236 = scmp.le.s32.totalorder 1, %s21
      %p237 = scmp.lt.s32.totalorder %s21, 3
      %p238 = pnand %p236, %p237
      %p239 = pneg %p238
      // Predicated region
      $region29: #{tpu_custom_call.1} parent=5 // pred_check
        _
      $region30: #{tpu_custom_call.1} parent=5 // pred_check_branch
        %241 = sbr.rel (%p238) target = $region32
      $region31: #{tpu_custom_call.1} parent=5 // pred_region
        %s242 = ssub.s32 %s21, 1
        %s243 = sand.u32 %s48, 1
        %s244 = scalar_lea.sflag [#allocation3], %s243
        %s245 = sand.u32 %s48, 1
        %s246 = smul.addr %s245, 8
        %s247 = scalar_lea.vmem [#allocation2], %s246
        // Predicated region
        $region33: #{tpu_custom_call.1} parent=31 // pred_check
          %p248 = pneg %p61
        $region34: #{tpu_custom_call.1} parent=31 // pred_check_branch
          %250 = sbr.rel (%p248) target = $region36
        $region35: #{tpu_custom_call.1} parent=31 // pred_region
          %252 = dma.done %s244, 128
        $region36: #{tpu_custom_call.1} parent=31 // pred_fallthru
          _
        // Predicated region
        $region37: #{tpu_custom_call.1} parent=31 // pred_check
          %p253 = pneg %p87
        $region38: #{tpu_custom_call.1} parent=31 // pred_check_branch
          %255 = sbr.rel (%p253) target = $region40
        $region39: #{tpu_custom_call.1} parent=31 // pred_region
          %257 = dma.done [#allocation6], 128
        $region40: #{tpu_custom_call.1} parent=31 // pred_fallthru
          _
        // Predicated region
        $region41: #{tpu_custom_call.1} parent=31 // pred_check
          %p258 = pneg %p113
        $region42: #{tpu_custom_call.1} parent=31 // pred_check_branch
          %260 = sbr.rel (%p258) target = $region44
        $region43: #{tpu_custom_call.1} parent=31 // pred_region
          %262 = dma.done [#allocation6], 128
        $region44: #{tpu_custom_call.1} parent=31 // pred_fallthru
          _
        %s263 = sand.u32 %s48, 1
        %s264 = scalar_lea.sflag [#allocation3], %s263
        %s265 = sand.u32 %s48, 1
        %s266 = smul.addr %s265, 8
        %s267 = scalar_lea.vmem [#allocation2], %s266
        %p268 = pneg %p61
        %p269 = pneg %p58
        %p270 = pneg %p87
        %p271 = pneg %p84
        %p272 = pneg %p113
        %p273 = pneg %p110
        %p274 = pneg %p141
        %p275 = pneg %p138
        %s276 = sand.u32 %s128, 1
        %s277 = scalar_lea.sflag [#allocation4], %s276
        %s278 = sand.u32 %s128, 1
        %s279 = smul.addr %s278, 8
        %s280 = scalar_lea.vmem [#allocation8], %s279
        %p281 = pneg %p169
        %p282 = pneg %p166
        %s283 = sand.u32 %s156, 1
        %s284 = scalar_lea.sflag [#allocation10], %s283
        %s285 = sand.u32 %s156, 1
        %s286 = smul.addr %s285, 8
        %s287 = scalar_lea.vmem [#allocation9], %s286
        %v288 = vld [vmem:[%s247] sm:$0xff]
        %v289 = vld [vmem:[#allocation5] sm:$0xff]
        %v290 = vld [vmem:[#allocation7] sm:$0xff]
        %v291 = vmul.f32 %v288, 0.17677669
        %292 = vmatpush.xpose.msra.mxu0 0.0
        %293 = vmatpush.xpose.msra.mxu0 0.0
        %294 = vmatpush.xpose.msra.mxu0 0.0
        %295 = vmatpush.xpose.msra.mxu0 0.0
        %296 = vmatpush.xpose.msra.mxu0 0.0
        %297 = vmatpush.xpose.msra.mxu0 0.0
        %298 = vmatpush.xpose.msra.mxu0 0.0
        %299 = vmatpush.xpose.msra.mxu0 0.0
        %300 = vmatpush.xpose.msra.mxu0 0.0
        %301 = vmatpush.xpose.msra.mxu0 0.0
        %302 = vmatpush.xpose.msra.mxu0 0.0
        %303 = vmatpush.xpose.msra.mxu0 0.0
        %304 = vmatpush.xpose.msra.mxu0 0.0
        %305 = vmatpush.xpose.msra.mxu0 0.0
        %306 = vmatpush.xpose.msra.mxu0 0.0
        %307 = vmatpush.xpose.msra.mxu0 %v289
        %308 = vmatmul.f32.gmra.mxu0 %v291
        %v309 = vpop.f32.mrf.mxu0
        %v310 = vadd.f32 0.0, %v309
        %311 = vdwg.mxu0
        %vm312 = vcmask 64512
        %v313 = vsel %vm312, %v310, -inf
        %314 = vmax.xlane.f32.xlu0 %v313
        %v315 = vpop.xlane.xlu0 %314
        %v316 = vsub.f32 %v310, %v315
        %v317 = vmul.f32 %v316, 1.442695
        %v318 = vpow.pop %v317
        %v319 = vsel %vm312, %v318, 0.0
        %320 = vadd.xlane.f32.xlu0 %v319
        %v321 = vpop.xlane.xlu0 %320
        %v322 = vrcp.pop %v321
        %v323 = vmul.f32 %v321, %v322
        %v324 = vsub.f32 1.0, %v323
        %v325 = vmul.f32 %v322, %v324
        %v326 = vadd.f32 %v322, %v325
        %vm327 = vweird.f32 %v321
        %vm328 = vweird.f32 %v322
        %vm329 = vmor %vm327, %vm328
        %v330 = vsel %vm329, %v322, %v326
        %v331 = vand.u32 2147483647, %v321
        %vm332 = vcmp.eq.f32.partialorder %v331, 8.507059e+37
        %v333 = vand.u32 %v321, 2147483648
        %v334 = vor.u32 1.1754944e-38, %v333
        %v335 = vsel %vm332, %v334, %v330
        %v336 = vmul.f32 %v318, %v335
        %v338 = vsel %vm312, %v336, 0
        %340 = vmatpush.msra.mxu0 0.0
        %341 = vmatpush.msra.mxu0 0.0
        %342 = vmatpush.msra.mxu0 0.0
        %343 = vmatpush.msra.mxu0 0.0
        %344 = vmatpush.msra.mxu0 0.0
        %345 = vmatpush.msra.mxu0 0.0
        %346 = vmatpush.msra.mxu0 0.0
        %347 = vmatpush.msra.mxu0 0.0
        %348 = vmatpush.msra.mxu0 0.0
        %349 = vmatpush.msra.mxu0 0.0
        %350 = vmatpush.msra.mxu0 0.0
        %351 = vmatpush.msra.mxu0 0.0
        %352 = vmatpush.msra.mxu0 0.0
        %353 = vmatpush.msra.mxu0 0.0
        %354 = vmatpush.msra.mxu0 0.0
        %355 = vmatpush.msra.mxu0 %v290
        %356 = vmatmul.f32.gmra.mxu0 %v338
        %v357 = vpop.f32.mrf.mxu0
        %v358 = vadd.f32 0.0, %v357
        %359 = vdwg.mxu0
        %360 = vst [vmem:[%s280] sm:$0xff] %v358
        %361 = vst.msk [vmem:[%s287] sm:$0xff] %vm312, %v336
        %s362 = sand.u32 %s128, 1
        %s363 = scalar_lea.sflag [#allocation4], %s362
        %s364 = sand.u32 %s128, 1
        %s365 = smul.addr %s364, 8
        %s366 = scalar_lea.vmem [#allocation8], %s365
        %s367 = sand.u32 %s156, 1
        %s368 = scalar_lea.sflag [#allocation10], %s367
        %s369 = sand.u32 %s156, 1
        %s370 = smul.addr %s369, 8
        %s371 = scalar_lea.vmem [#allocation9], %s370
        // Predicated region
        $region45: #{tpu_custom_call.1} parent=31 // pred_check
          %p372 = pneg %p138
        $region46: #{tpu_custom_call.1} parent=31 // pred_check_branch
          %374 = sbr.rel (%p372) target = $region48
        $region47: #{tpu_custom_call.1} parent=31 // pred_region
          %376 = vsyncadd %s363, 0
          %s377 = sadd.s32 %s31, %s30
          %s378 = smul.addr %s377, 8
          %s379 = scalar_lea.hbm %s3, %s378
          %s381 = sshll.u32 %s366, 4
          %s382 = int_to_ptr.vmem [resolvable:$true] %s381
          %s383 = sshll.u32 %s379, 4
          %s384 = int_to_ptr.hbm [resolvable:$true] %s383
          %386 = dma.vmem_to_hbm [thread:$0]  %s382, 128, %s384, %s363
        $region48: #{tpu_custom_call.1} parent=31 // pred_fallthru
          _
        // Predicated region
        $region49: #{tpu_custom_call.1} parent=31 // pred_check
          %p387 = pneg %p166
        $region50: #{tpu_custom_call.1} parent=31 // pred_check_branch
          %389 = sbr.rel (%p387) target = $region52
        $region51: #{tpu_custom_call.1} parent=31 // pred_region
          %391 = vsyncadd %s368, 0
          %s392 = sadd.s32 %s31, %s30
          %s393 = smul.addr %s392, 8
          %s394 = scalar_lea.hbm %s4, %s393
          %s396 = sshll.u32 %s371, 4
          %s397 = int_to_ptr.vmem [resolvable:$true] %s396
          %s398 = sshll.u32 %s394, 4
          %s399 = int_to_ptr.hbm [resolvable:$true] %s398
          %401 = dma.vmem_to_hbm [thread:$0]  %s397, 128, %s399, %s368
        $region52: #{tpu_custom_call.1} parent=31 // pred_fallthru
          _
      $region32: #{tpu_custom_call.1} parent=5 // pred_fallthru
        _
      %p402 = scmp.le.s32.totalorder 2, %s21
      // Predicated region
      $region53: #{tpu_custom_call.1} parent=5 // pred_check
        %p403 = pneg %p402
      $region54: #{tpu_custom_call.1} parent=5 // pred_check_branch
        %405 = sbr.rel (%p403) target = $region56
      $region55: #{tpu_custom_call.1} parent=5 // pred_region
        %s406 = ssub.s32 %s21, 2
        // Predicated region
        $region57: #{tpu_custom_call.1} parent=55 // pred_check
          %p407 = pneg %p144
        $region58: #{tpu_custom_call.1} parent=55 // pred_check_branch
          %409 = sbr.rel (%p407) target = $region60
        $region59: #{tpu_custom_call.1} parent=55 // pred_region
          %s410 = sand.u32 %s129, 1
          %s411 = scalar_lea.sflag [#allocation4], %s410
          %s412 = sand.u32 %s129, 1
          %s413 = smul.addr %s412, 8
          %s414 = scalar_lea.vmem [#allocation8], %s413
          %416 = dma.done %s411, 128
        $region60: #{tpu_custom_call.1} parent=55 // pred_fallthru
          _
        // Predicated region
        $region61: #{tpu_custom_call.1} parent=55 // pred_check
          %p417 = pneg %p172
        $region62: #{tpu_custom_call.1} parent=55 // pred_check_branch
          %419 = sbr.rel (%p417) target = $region64
        $region63: #{tpu_custom_call.1} parent=55 // pred_region
          %s420 = sand.u32 %s157, 1
          %s421 = scalar_lea.sflag [#allocation10], %s420
          %s422 = sand.u32 %s157, 1
          %s423 = smul.addr %s422, 8
          %s424 = scalar_lea.vmem [#allocation9], %s423
          %426 = dma.done %s421, 128
        $region64: #{tpu_custom_call.1} parent=55 // pred_fallthru
          _
      $region56: #{tpu_custom_call.1} parent=5 // pred_fallthru
        _
    $region6: #{tpu_custom_call.1} parent=1 // loop_footer
      %s25 = sadd.s32 1, %s21
    $region7: #{tpu_custom_call.1} parent=1 // loop_footer_branch
      %20 = sbr.rel target = $region3
    $region8: #{tpu_custom_call.1} parent=1 // loop_exit
      _
    %427 = vsyncpa [#allocation3], 1
    %s428 = scalar_lea.sflag [#allocation3], 1
    %429 = vsyncpa %s428, 1
    %430 = vsyncpa [#allocation6], 1
    %431 = vsyncpa [#allocation4], 1
    %s432 = scalar_lea.sflag [#allocation4], 1
    %433 = vsyncpa %s432, 1
    %434 = vsyncpa [#allocation10], 1
    %s435 = scalar_lea.sflag [#allocation10], 1
    %436 = vsyncpa %s435, 1

// kernel: tpu_custom_call.1
$region0: #{tpu_custom_call.1}
  #allocation0 [shape = 'u32[]', space=smem, size = 0x4, offset = 0x4, fixed_abs, tag = 'smem constant byte address 0x4 - core index']
  #allocation1 [shape = 'u32[72,128]{1,0:T(1,128)}', space=vmem, size = 0x9000, scoped, tag = 'internal scratch']
  %s0 = inlined_call_operand.hbm [shape: f32[2,8,128], index: 0, kind: input, shape index: {}]
  %s1 = inlined_call_operand.hbm [shape: f32[2,8,128], index: 1, kind: input, shape index: {}]
  %s2 = inlined_call_operand.hbm [shape: f32[2,8,128], index: 2, kind: input, shape index: {}]
  %s3 = inlined_call_operand.hbm [shape: f32[2,8,128], index: 3, kind: output, shape index: {0}]
  %s4 = inlined_call_operand.hbm [shape: f32[2,8,8], index: 4, kind: output, shape index: {1}]
  %5 = xla_tuple %s3, %s4
  %s6 = sld [smem:[#allocation0]]
  $region65: #{tpu_custom_call.1} parent=0
    _
  %s8 = ssub.s32 1, %s6
  %s9 = scalar_select 0, %s8, %s6
  $region1: #{tpu_custom_call.1} parent=0
    #allocation2 [shape = 'u8[8192]{0}', space=vmem, size = 0x2000, scoped, tag = 'input window, operand 0']
    #allocation3 [shape = 's32[2]{0}', space=sflag, size = 0x8, scoped, tag = 'scoped memory for tpu_custom_call.1']
    #allocation4 [shape = 's32[2]{0}', space=sflag, size = 0x8, scoped, tag = 'scoped memory for tpu_custom_call.1']
    #allocation5 [shape = 'u8[8192]{0}', space=vmem, size = 0x2000, scoped, tag = 'input window, operand 1']
    #allocation6 [shape = 's32[2]{0}', space=sflag, size = 0x8, scoped, tag = 'scoped memory for tpu_custom_call.1']
    #allocation7 [shape = 'u8[8192]{0}', space=vmem, size = 0x2000, scoped, tag = 'input window, operand 2']
    #allocation8 [shape = 'u8[8192]{0}', space=vmem, size = 0x2000, scoped, tag = 'output window, operand 0']
    #allocation9 [shape = 'u8[8192]{0}', space=vmem, size = 0x2000, scoped, tag = 'output window, operand 1']
    #allocation10 [shape = 's32[2]{0}', space=sflag, size = 0x8, scoped, tag = 'scoped memory for tpu_custom_call.1']
    %10 = vsyncpa [#allocation3], 0
    %s11 = scalar_lea.sflag [#allocation3], 1
    %12 = vsyncpa %s11, 0
    %13 = vsyncpa [#allocation6], 0
    %s14 = scalar_lea.sflag [#allocation6], 1
    %15 = vsyncpa %s14, 0
    %16 = vsyncpa [#allocation4], 0
    %s17 = scalar_lea.sflag [#allocation4], 1
    %18 = vsyncpa %s17, 0
    %19 = vsyncpa [#allocation10], 0
    %s20 = scalar_lea.sflag [#allocation10], 1
    %21 = vsyncpa %s20, 0
    loop: start=0, step=1, limit=4
    $region2: #{tpu_custom_call.1} parent=1 // loop_pre_header
      _
    $region3: #{tpu_custom_call.1} parent=1 // loop_header
      %s23 = sphi 0, %s27
      %p24 = scmp.ge.s32.totalorder %s23, 4
      %s30 = sphi 0, %s42
      %s31 = sphi 0, %s38
      %s32 = sphi 0, %s30
      %s33 = sphi 0, %s31
      %s34 = sphi 0, %s32
      %s35 = sphi 0, %s33
      %s47 = sphi 0, %s49
      %s50 = sphi 0, %s47
      %s51 = sphi 0, %s50
      %s67 = sphi 0, %s51
      %s73 = sphi 0, %s75
      %s76 = sphi 0, %s73
      %s77 = sphi 0, %s76
      %s93 = sphi 0, %s77
      %s99 = sphi 0, %s101
      %s102 = sphi 0, %s99
      %s103 = sphi 0, %s102
      %s119 = sphi 0, %s103
      %s127 = sphi 0, %s129
      %s130 = sphi 0, %s127
      %s131 = sphi 0, %s130
      %s147 = sphi 0, %s131
      %s155 = sphi 0, %s157
      %s158 = sphi 0, %s155
      %s159 = sphi 0, %s158
      %s175 = sphi 0, %s159
    $region4: #{tpu_custom_call.1} parent=1 // loop_header_branch
      %26 = sbr.rel (%p24) target = $region8
    $region5: #{tpu_custom_call.1} parent=1 // loop_body
      %s28 = ssub.s32 %s23, 1
      %s29 = ssub.s32 %s23, 2
      %s36 = sadd.s32 1, %s31
      %p37 = scmp.ge.s32.totalorder %s36, 1
      %s38 = scalar_select %p37, 0, %s36
      %s39 = sadd.s32 1, %s30
      %s40 = scalar_select %p37, %s39, %s30
      %p41 = scmp.ge.s32.totalorder %s40, 2
      %s42 = scalar_select %p41, 0, %s40
      %s43 = ssub.s32 %s30, %s42
      %s44 = ssub.s32 %s31, %s38
      %s45 = sor.u32 %s43, %s44
      %p46 = scmp.eq.s32.totalorder %s45, 0
      %s48 = sadd.s32 %s47, 1
      %s49 = scalar_select %p46, %s47, %s48
      %p52 = pneg %p46
      %p53 = scmp.eq.s32.totalorder %s23, 1
      %p54 = por %p52, %p53
      %p55 = scmp.ne.s32.totalorder %s47, %s50
      %p56 = scmp.eq.s32.totalorder %s23, 0
      %p57 = por %p55, %p56
      %p58 = scmp.ne.s32.totalorder %s47, %s50
      %p59 = scmp.eq.s32.totalorder %s28, 1
      %p60 = por %p58, %p59
      %p61 = scmp.ne.s32.totalorder %s50, %s51
      %p62 = scmp.eq.s32.totalorder %s28, 0
      %p63 = por %p61, %p62
      %p64 = scmp.ne.s32.totalorder %s50, %s51
      %p65 = scmp.eq.s32.totalorder %s29, 1
      %p66 = por %p64, %p65
      %p68 = scmp.ne.s32.totalorder %s51, %s67
      %p69 = scmp.eq.s32.totalorder %s29, 0
      %p70 = por %p68, %p69
      %s71 = ssub.s32 %s30, %s42
      %p72 = scmp.eq.s32.totalorder %s71, 0
      %s74 = sadd.s32 %s73, 1
      %s75 = scalar_select %p72, %s73, %s74
      %p78 = pneg %p72
      %p79 = scmp.eq.s32.totalorder %s23, 1
      %p80 = por %p78, %p79
      %p81 = scmp.ne.s32.totalorder %s73, %s76
      %p82 = scmp.eq.s32.totalorder %s23, 0
      %p83 = por %p81, %p82
      %p84 = scmp.ne.s32.totalorder %s73, %s76
      %p85 = scmp.eq.s32.totalorder %s28, 1
      %p86 = por %p84, %p85
      %p87 = scmp.ne.s32.totalorder %s76, %s77
      %p88 = scmp.eq.s32.totalorder %s28, 0
      %p89 = por %p87, %p88
      %p90 = scmp.ne.s32.totalorder %s76, %s77
      %p91 = scmp.eq.s32.totalorder %s29, 1
      %p92 = por %p90, %p91
      %p94 = scmp.ne.s32.totalorder %s77, %s93
      %p95 = scmp.eq.s32.totalorder %s29, 0
      %p96 = por %p94, %p95
      %s97 = ssub.s32 %s30, %s42
      %p98 = scmp.eq.s32.totalorder %s97, 0
      %s100 = sadd.s32 %s99, 1
      %s101 = scalar_select %p98, %s99, %s100
      %p104 = pneg %p98
      %p105 = scmp.eq.s32.totalorder %s23, 1
      %p106 = por %p104, %p105
      %p107 = scmp.ne.s32.totalorder %s99, %s102
      %p108 = scmp.eq.s32.totalorder %s23, 0
      %p109 = por %p107, %p108
      %p110 = scmp.ne.s32.totalorder %s99, %s102
      %p111 = scmp.eq.s32.totalorder %s28, 1
      %p112 = por %p110, %p111
      %p113 = scmp.ne.s32.totalorder %s102, %s103
      %p114 = scmp.eq.s32.totalorder %s28, 0
      %p115 = por %p113, %p114
      %p116 = scmp.ne.s32.totalorder %s102, %s103
      %p117 = scmp.eq.s32.totalorder %s29, 1
      %p118 = por %p116, %p117
      %p120 = scmp.ne.s32.totalorder %s103, %s119
      %p121 = scmp.eq.s32.totalorder %s29, 0
      %p122 = por %p120, %p121
      %s123 = ssub.s32 %s30, %s42
      %s124 = ssub.s32 %s31, %s38
      %s125 = sor.u32 %s123, %s124
      %p126 = scmp.eq.s32.totalorder %s125, 0
      %s128 = sadd.s32 %s127, 1
      %s129 = scalar_select %p126, %s127, %s128
      %p132 = pneg %p126
      %p133 = scmp.eq.s32.totalorder %s23, 1
      %p134 = por %p132, %p133
      %p135 = scmp.ne.s32.totalorder %s127, %s130
      %p136 = scmp.eq.s32.totalorder %s23, 0
      %p137 = por %p135, %p136
      %p138 = scmp.ne.s32.totalorder %s127, %s130
      %p139 = scmp.eq.s32.totalorder %s28, 1
      %p140 = por %p138, %p139
      %p141 = scmp.ne.s32.totalorder %s130, %s131
      %p142 = scmp.eq.s32.totalorder %s28, 0
      %p143 = por %p141, %p142
      %p144 = scmp.ne.s32.totalorder %s130, %s131
      %p145 = scmp.eq.s32.totalorder %s29, 1
      %p146 = por %p144, %p145
      %p148 = scmp.ne.s32.totalorder %s131, %s147
      %p149 = scmp.eq.s32.totalorder %s29, 0
      %p150 = por %p148, %p149
      %s151 = ssub.s32 %s30, %s42
      %s152 = ssub.s32 %s31, %s38
      %s153 = sor.u32 %s151, %s152
      %p154 = scmp.eq.s32.totalorder %s153, 0
      %s156 = sadd.s32 %s155, 1
      %s157 = scalar_select %p154, %s155, %s156
      %p160 = pneg %p154
      %p161 = scmp.eq.s32.totalorder %s23, 1
      %p162 = por %p160, %p161
      %p163 = scmp.ne.s32.totalorder %s155, %s158
      %p164 = scmp.eq.s32.totalorder %s23, 0
      %p165 = por %p163, %p164
      %p166 = scmp.ne.s32.totalorder %s155, %s158
      %p167 = scmp.eq.s32.totalorder %s28, 1
      %p168 = por %p166, %p167
      %p169 = scmp.ne.s32.totalorder %s158, %s159
      %p170 = scmp.eq.s32.totalorder %s28, 0
      %p171 = por %p169, %p170
      %p172 = scmp.ne.s32.totalorder %s158, %s159
      %p173 = scmp.eq.s32.totalorder %s29, 1
      %p174 = por %p172, %p173
      %p176 = scmp.ne.s32.totalorder %s159, %s175
      %p177 = scmp.eq.s32.totalorder %s29, 0
      %p178 = por %p176, %p177
      %p179 = scmp.le.s32.totalorder 1, %s23
      %p180 = scmp.lt.s32.totalorder %s23, 3
      %p181 = pnand %p179, %p180
      %p182 = pneg %p181
      // Predicated region
      $region9: #{tpu_custom_call.1} parent=5 // pred_check
        _
      $region10: #{tpu_custom_call.1} parent=5 // pred_check_branch
        %184 = sbr.rel (%p181) target = $region12
      $region11: #{tpu_custom_call.1} parent=5 // pred_region
        %s185 = ssub.s32 %s23, 1
      $region12: #{tpu_custom_call.1} parent=5 // pred_fallthru
        _
      %p186 = scmp.lt.s32.totalorder %s23, 2
      // Predicated region
      $region13: #{tpu_custom_call.1} parent=5 // pred_check
        %p187 = pneg %p186
      $region14: #{tpu_custom_call.1} parent=5 // pred_check_branch
        %189 = sbr.rel (%p187) target = $region16
      $region15: #{tpu_custom_call.1} parent=5 // pred_region
        // Predicated region
        $region17: #{tpu_custom_call.1} parent=15 // pred_check
          %p190 = pneg %p57
        $region18: #{tpu_custom_call.1} parent=15 // pred_check_branch
          %192 = sbr.rel (%p190) target = $region20
        $region19: #{tpu_custom_call.1} parent=15 // pred_region
          %s193 = sand.u32 %s47, 1
          %s194 = scalar_lea.sflag [#allocation3], %s193
          %s195 = sand.u32 %s47, 1
          %s196 = smul.addr %s195, 8
          %s197 = scalar_lea.vmem [#allocation2], %s196
          %199 = vsyncadd %s194, 0
          %s200 = sadd.s32 %s31, %s30
          %s201 = smul.addr %s200, 8
          %s202 = scalar_lea.hbm %s0, %s201
          %s204 = sshll.u32 %s202, 4
          %s205 = int_to_ptr.hbm [resolvable:$true] %s204
          %s206 = sshll.u32 %s197, 4
          %s207 = int_to_ptr.vmem [resolvable:$true] %s206
          %209 = dma.hbm_to_vmem [thread:$0]  %s205, 128, %s207, %s194
        $region20: #{tpu_custom_call.1} parent=15 // pred_fallthru
          _
        // Predicated region
        $region21: #{tpu_custom_call.1} parent=15 // pred_check
          %p210 = pneg %p83
        $region22: #{tpu_custom_call.1} parent=15 // pred_check_branch
          %212 = sbr.rel (%p210) target = $region24
        $region23: #{tpu_custom_call.1} parent=15 // pred_region
          %s213 = sand.u32 %s23, 1
          %s214 = scalar_lea.sflag [#allocation6], %s213
          %s215 = sand.u32 %s73, 1
          %s216 = smul.addr %s215, 8
          %s217 = scalar_lea.vmem [#allocation5], %s216
          %219 = vsyncadd %s214, 0
          %s220 = smul.addr %s30, 8
          %s221 = scalar_lea.hbm %s1, %s220
          %s223 = sshll.u32 %s221, 4
          %s224 = int_to_ptr.hbm [resolvable:$true] %s223
          %s225 = sshll.u32 %s217, 4
          %s226 = int_to_ptr.vmem [resolvable:$true] %s225
          %228 = dma.hbm_to_vmem [thread:$0]  %s224, 128, %s226, %s214
        $region24: #{tpu_custom_call.1} parent=15 // pred_fallthru
          _
        // Predicated region
        $region25: #{tpu_custom_call.1} parent=15 // pred_check
          %p229 = pneg %p109
        $region26: #{tpu_custom_call.1} parent=15 // pred_check_branch
          %231 = sbr.rel (%p229) target = $region28
        $region27: #{tpu_custom_call.1} parent=15 // pred_region
          %s232 = sand.u32 %s23, 1
          %s233 = scalar_lea.sflag [#allocation6], %s232
          %s234 = sand.u32 %s99, 1
          %s235 = smul.addr %s234, 8
          %s236 = scalar_lea.vmem [#allocation7], %s235
          %238 = vsyncadd %s233, 0
          %s239 = smul.addr %s30, 8
          %s240 = scalar_lea.hbm %s2, %s239
          %s242 = sshll.u32 %s240, 4
          %s243 = int_to_ptr.hbm [resolvable:$true] %s242
          %s244 = sshll.u32 %s236, 4
          %s245 = int_to_ptr.vmem [resolvable:$true] %s244
          %247 = dma.hbm_to_vmem [thread:$0]  %s243, 128, %s245, %s233
        $region28: #{tpu_custom_call.1} parent=15 // pred_fallthru
          _
      $region16: #{tpu_custom_call.1} parent=5 // pred_fallthru
        _
      %p248 = scmp.le.s32.totalorder 1, %s23
      %p249 = scmp.lt.s32.totalorder %s23, 3
      %p250 = pnand %p248, %p249
      %p251 = pneg %p250
      // Predicated region
      $region29: #{tpu_custom_call.1} parent=5 // pred_check
        _
      $region30: #{tpu_custom_call.1} parent=5 // pred_check_branch
        %253 = sbr.rel (%p250) target = $region32
      $region31: #{tpu_custom_call.1} parent=5 // pred_region
        %s254 = ssub.s32 %s23, 1
        %s255 = sand.u32 %s50, 1
        %s256 = scalar_lea.sflag [#allocation3], %s255
        %s257 = sand.u32 %s50, 1
        %s258 = smul.addr %s257, 8
        %s259 = scalar_lea.vmem [#allocation2], %s258
        // Predicated region
        $region33: #{tpu_custom_call.1} parent=31 // pred_check
          %p260 = pneg %p63
        $region34: #{tpu_custom_call.1} parent=31 // pred_check_branch
          %262 = sbr.rel (%p260) target = $region36
        $region35: #{tpu_custom_call.1} parent=31 // pred_region
          %264 = dma.done %s256, 128
        $region36: #{tpu_custom_call.1} parent=31 // pred_fallthru
          _
        %s265 = sand.u32 %s28, 1
        %s266 = scalar_lea.sflag [#allocation6], %s265
        %s267 = sand.u32 %s76, 1
        %s268 = smul.addr %s267, 8
        %s269 = scalar_lea.vmem [#allocation5], %s268
        // Predicated region
        $region37: #{tpu_custom_call.1} parent=31 // pred_check
          %p270 = pneg %p89
        $region38: #{tpu_custom_call.1} parent=31 // pred_check_branch
          %272 = sbr.rel (%p270) target = $region40
        $region39: #{tpu_custom_call.1} parent=31 // pred_region
          %274 = dma.done %s266, 128
        $region40: #{tpu_custom_call.1} parent=31 // pred_fallthru
          _
        %s275 = sand.u32 %s28, 1
        %s276 = scalar_lea.sflag [#allocation6], %s275
        %s277 = sand.u32 %s102, 1
        %s278 = smul.addr %s277, 8
        %s279 = scalar_lea.vmem [#allocation7], %s278
        // Predicated region
        $region41: #{tpu_custom_call.1} parent=31 // pred_check
          %p280 = pneg %p115
        $region42: #{tpu_custom_call.1} parent=31 // pred_check_branch
          %282 = sbr.rel (%p280) target = $region44
        $region43: #{tpu_custom_call.1} parent=31 // pred_region
          %284 = dma.done %s276, 128
        $region44: #{tpu_custom_call.1} parent=31 // pred_fallthru
          _
        %s285 = sand.u32 %s50, 1
        %s286 = scalar_lea.sflag [#allocation3], %s285
        %s287 = sand.u32 %s50, 1
        %s288 = smul.addr %s287, 8
        %s289 = scalar_lea.vmem [#allocation2], %s288
        %p290 = pneg %p63
        %p291 = pneg %p60
        %s292 = sand.u32 %s28, 1
        %s293 = scalar_lea.sflag [#allocation6], %s292
        %s294 = sand.u32 %s76, 1
        %s295 = smul.addr %s294, 8
        %s296 = scalar_lea.vmem [#allocation5], %s295
        %p297 = pneg %p89
        %p298 = pneg %p86
        %s299 = sand.u32 %s28, 1
        %s300 = scalar_lea.sflag [#allocation6], %s299
        %s301 = sand.u32 %s102, 1
        %s302 = smul.addr %s301, 8
        %s303 = scalar_lea.vmem [#allocation7], %s302
        %p304 = pneg %p115
        %p305 = pneg %p112
        %p306 = pneg %p143
        %p307 = pneg %p140
        %s308 = sand.u32 %s130, 1
        %s309 = scalar_lea.sflag [#allocation4], %s308
        %s310 = sand.u32 %s130, 1
        %s311 = smul.addr %s310, 8
        %s312 = scalar_lea.vmem [#allocation8], %s311
        %p313 = pneg %p171
        %p314 = pneg %p168
        %s315 = sand.u32 %s158, 1
        %s316 = scalar_lea.sflag [#allocation10], %s315
        %s317 = sand.u32 %s158, 1
        %s318 = smul.addr %s317, 8
        %s319 = scalar_lea.vmem [#allocation9], %s318
        %v320 = vld [vmem:[%s259] sm:$0xff]
        %v321 = vld [vmem:[%s269] sm:$0xff]
        %v322 = vld [vmem:[%s279] sm:$0xff]
        %v323 = vmul.f32 %v320, 0.17677669
        %324 = vmatpush.xpose.msra.mxu0 0.0
        %325 = vmatpush.xpose.msra.mxu0 0.0
        %326 = vmatpush.xpose.msra.mxu0 0.0
        %327 = vmatpush.xpose.msra.mxu0 0.0
        %328 = vmatpush.xpose.msra.mxu0 0.0
        %329 = vmatpush.xpose.msra.mxu0 0.0
        %330 = vmatpush.xpose.msra.mxu0 0.0
        %331 = vmatpush.xpose.msra.mxu0 0.0
        %332 = vmatpush.xpose.msra.mxu0 0.0
        %333 = vmatpush.xpose.msra.mxu0 0.0
        %334 = vmatpush.xpose.msra.mxu0 0.0
        %335 = vmatpush.xpose.msra.mxu0 0.0
        %336 = vmatpush.xpose.msra.mxu0 0.0
        %337 = vmatpush.xpose.msra.mxu0 0.0
        %338 = vmatpush.xpose.msra.mxu0 0.0
        %339 = vmatpush.xpose.msra.mxu0 %v321
        %340 = vmatmul.f32.gmra.mxu0 %v323
        %v341 = vpop.f32.mrf.mxu0
        %v342 = vadd.f32 0.0, %v341
        %343 = vdwg.mxu0
        %vm344 = vcmask 64512
        %v345 = vsel %vm344, %v342, -inf
        %346 = vmax.xlane.f32.xlu0 %v345
        %v347 = vpop.xlane.xlu0 %346
        %v348 = vsub.f32 %v342, %v347
        %v349 = vmul.f32 %v348, 1.442695
        %v350 = vpow.pop %v349
        %v351 = vsel %vm344, %v350, 0.0
        %352 = vadd.xlane.f32.xlu0 %v351
        %v353 = vpop.xlane.xlu0 %352
        %v354 = vrcp.pop %v353
        %v355 = vmul.f32 %v353, %v354
        %v356 = vsub.f32 1.0, %v355
        %v357 = vmul.f32 %v354, %v356
        %v358 = vadd.f32 %v354, %v357
        %vm359 = vweird.f32 %v353
        %vm360 = vweird.f32 %v354
        %vm361 = vmor %vm359, %vm360
        %v362 = vsel %vm361, %v354, %v358
        %v363 = vand.u32 2147483647, %v353
        %vm364 = vcmp.eq.f32.partialorder %v363, 8.507059e+37
        %v365 = vand.u32 %v353, 2147483648
        %v366 = vor.u32 1.1754944e-38, %v365
        %v367 = vsel %vm364, %v366, %v362
        %v368 = vmul.f32 %v350, %v367
        %v370 = vsel %vm344, %v368, 0
        %372 = vmatpush.msra.mxu0 0.0
        %373 = vmatpush.msra.mxu0 0.0
        %374 = vmatpush.msra.mxu0 0.0
        %375 = vmatpush.msra.mxu0 0.0
        %376 = vmatpush.msra.mxu0 0.0
        %377 = vmatpush.msra.mxu0 0.0
        %378 = vmatpush.msra.mxu0 0.0
        %379 = vmatpush.msra.mxu0 0.0
        %380 = vmatpush.msra.mxu0 0.0
        %381 = vmatpush.msra.mxu0 0.0
        %382 = vmatpush.msra.mxu0 0.0
        %383 = vmatpush.msra.mxu0 0.0
        %384 = vmatpush.msra.mxu0 0.0
        %385 = vmatpush.msra.mxu0 0.0
        %386 = vmatpush.msra.mxu0 0.0
        %387 = vmatpush.msra.mxu0 %v322
        %388 = vmatmul.f32.gmra.mxu0 %v370
        %v389 = vpop.f32.mrf.mxu0
        %v390 = vadd.f32 0.0, %v389
        %391 = vdwg.mxu0
        %392 = vst [vmem:[%s312] sm:$0xff] %v390
        %393 = vst.msk [vmem:[%s319] sm:$0xff] %vm344, %v368
        %s394 = sand.u32 %s130, 1
        %s395 = scalar_lea.sflag [#allocation4], %s394
        %s396 = sand.u32 %s130, 1
        %s397 = smul.addr %s396, 8
        %s398 = scalar_lea.vmem [#allocation8], %s397
        %s399 = sand.u32 %s158, 1
        %s400 = scalar_lea.sflag [#allocation10], %s399
        %s401 = sand.u32 %s158, 1
        %s402 = smul.addr %s401, 8
        %s403 = scalar_lea.vmem [#allocation9], %s402
        // Predicated region
        $region45: #{tpu_custom_call.1} parent=31 // pred_check
          %p404 = pneg %p140
        $region46: #{tpu_custom_call.1} parent=31 // pred_check_branch
          %406 = sbr.rel (%p404) target = $region48
        $region47: #{tpu_custom_call.1} parent=31 // pred_region
          %408 = vsyncadd %s395, 0
          %s409 = sadd.s32 %s33, %s32
          %s410 = smul.addr %s409, 8
          %s411 = scalar_lea.hbm %s3, %s410
          %s413 = sshll.u32 %s398, 4
          %s414 = int_to_ptr.vmem [resolvable:$true] %s413
          %s415 = sshll.u32 %s411, 4
          %s416 = int_to_ptr.hbm [resolvable:$true] %s415
          %418 = dma.vmem_to_hbm [thread:$0]  %s414, 128, %s416, %s395
        $region48: #{tpu_custom_call.1} parent=31 // pred_fallthru
          _
        // Predicated region
        $region49: #{tpu_custom_call.1} parent=31 // pred_check
          %p419 = pneg %p168
        $region50: #{tpu_custom_call.1} parent=31 // pred_check_branch
          %421 = sbr.rel (%p419) target = $region52
        $region51: #{tpu_custom_call.1} parent=31 // pred_region
          %423 = vsyncadd %s400, 0
          %s424 = sadd.s32 %s33, %s32
          %s425 = smul.addr %s424, 8
          %s426 = scalar_lea.hbm %s4, %s425
          %s428 = sshll.u32 %s403, 4
          %s429 = int_to_ptr.vmem [resolvable:$true] %s428
          %s430 = sshll.u32 %s426, 4
          %s431 = int_to_ptr.hbm [resolvable:$true] %s430
          %433 = dma.vmem_to_hbm [thread:$0]  %s429, 128, %s431, %s400
        $region52: #{tpu_custom_call.1} parent=31 // pred_fallthru
          _
      $region32: #{tpu_custom_call.1} parent=5 // pred_fallthru
        _
      %p434 = scmp.le.s32.totalorder 2, %s23
      // Predicated region
      $region53: #{tpu_custom_call.1} parent=5 // pred_check
        %p435 = pneg %p434
      $region54: #{tpu_custom_call.1} parent=5 // pred_check_branch
        %437 = sbr.rel (%p435) target = $region56
      $region55: #{tpu_custom_call.1} parent=5 // pred_region
        %s438 = ssub.s32 %s23, 2
        // Predicated region
        $region57: #{tpu_custom_call.1} parent=55 // pred_check
          %p439 = pneg %p146
        $region58: #{tpu_custom_call.1} parent=55 // pred_check_branch
          %441 = sbr.rel (%p439) target = $region60
        $region59: #{tpu_custom_call.1} parent=55 // pred_region
          %s442 = sand.u32 %s131, 1
          %s443 = scalar_lea.sflag [#allocation4], %s442
          %s444 = sand.u32 %s131, 1
          %s445 = smul.addr %s444, 8
          %s446 = scalar_lea.vmem [#allocation8], %s445
          %448 = dma.done %s443, 128
        $region60: #{tpu_custom_call.1} parent=55 // pred_fallthru
          _
        // Predicated region
        $region61: #{tpu_custom_call.1} parent=55 // pred_check
          %p449 = pneg %p174
        $region62: #{tpu_custom_call.1} parent=55 // pred_check_branch
          %451 = sbr.rel (%p449) target = $region64
        $region63: #{tpu_custom_call.1} parent=55 // pred_region
          %s452 = sand.u32 %s159, 1
          %s453 = scalar_lea.sflag [#allocation10], %s452
          %s454 = sand.u32 %s159, 1
          %s455 = smul.addr %s454, 8
          %s456 = scalar_lea.vmem [#allocation9], %s455
          %458 = dma.done %s453, 128
        $region64: #{tpu_custom_call.1} parent=55 // pred_fallthru
          _
      $region56: #{tpu_custom_call.1} parent=5 // pred_fallthru
        _
    $region6: #{tpu_custom_call.1} parent=1 // loop_footer
      %s27 = sadd.s32 1, %s23
    $region7: #{tpu_custom_call.1} parent=1 // loop_footer_branch
      %22 = sbr.rel target = $region3
    $region8: #{tpu_custom_call.1} parent=1 // loop_exit
      _
    %459 = vsyncpa [#allocation3], 1
    %s460 = scalar_lea.sflag [#allocation3], 1
    %461 = vsyncpa %s460, 1
    %462 = vsyncpa [#allocation6], 1
    %s463 = scalar_lea.sflag [#allocation6], 1
    %464 = vsyncpa %s463, 1
    %465 = vsyncpa [#allocation4], 1
    %s466 = scalar_lea.sflag [#allocation4], 1
    %467 = vsyncpa %s466, 1
    %468 = vsyncpa [#allocation10], 1
    %s469 = scalar_lea.sflag [#allocation10], 1
    %470 = vsyncpa %s469, 1

</llo_original>
